<compile_context>
chip_gen: v6e
topology: v6e:2x2x1
jax: 0.10.0
libtpu: 0.0.40
codegen_flags: <defaults>
</compile_context>

<pallas_src>
import math

import jax
import jax.numpy as jnp
from jax.experimental import pallas as pl
from jax.experimental.pallas import tpu as pltpu

_LANE = 128  # vreg lane width -> lane-dense (unmasked) stores / MXU-friendly dims


def _round_up(x, m):
    return (x + m - 1) // m * m


def _make_mlp_kernel(num_layers):
    """Fused MLP forward. Per layer refs: (bn_scale, bn_shift, W_t, bias)."""

    def kernel(*refs):
        x_ref = refs[0]
        o_ref = refs[-1]
        params = refs[1:-1]
        h = x_ref[...]
        for i in range(num_layers):
            s_ref, t_ref, w_ref, b_ref = params[4 * i: 4 * i + 4]
            h = h * s_ref[...] + t_ref[...]            # BatchNorm1d (eval, folded affine)
            if i > 0:
                h = jnp.maximum(h, 0.0)                # ReLU
            # Dropout(p=0) / eval mode -> identity.
            h = jnp.dot(h, w_ref[...], preferred_element_type=jnp.float32) + b_ref[...]
        o_ref[...] = h.astype(o_ref.dtype)

    return kernel


def mlp_forward(x, layer_params, *, block_rows=128):
    """x: [N, in_dim]; layer_params: list of dicts with keys
    weight [out,in] (torch layout), bias [out], gamma/beta/mean/var [in], eps."""
    n, in_dim = x.shape
    num_layers = len(layer_params)

    dims = [in_dim] + [int(p["weight"].shape[0]) for p in layer_params]
    dims_pad = [_round_up(d, _LANE) for d in dims]
    n_pad = _round_up(n, block_rows)

    x_p = jnp.zeros((n_pad, dims_pad[0]), jnp.float32)
    x_p = x_p.at[:n, :in_dim].set(x.astype(jnp.float32))

    flat_args = [x_p]
    in_specs = [pl.BlockSpec((block_rows, dims_pad[0]), lambda i: (i, 0))]
    flops = 0
    for li, p in enumerate(layer_params):
        f_in, f_out = dims[li], dims[li + 1]
        f_in_p, f_out_p = dims_pad[li], dims_pad[li + 1]

        # Fold eval-mode BN into per-feature affine; pre-transpose Linear weight.
        inv_std = 1.0 / jnp.sqrt(p["var"].astype(jnp.float32) + p["eps"])
        scale = p["gamma"].astype(jnp.float32) * inv_std
        shift = p["beta"].astype(jnp.float32) - p["mean"].astype(jnp.float32) * scale
        w_t = p["weight"].astype(jnp.float32).T        # [in, out]
        b = p["bias"].astype(jnp.float32)

        scale_p = jnp.zeros((1, f_in_p), jnp.float32).at[0, :f_in].set(scale)
        shift_p = jnp.zeros((1, f_in_p), jnp.float32).at[0, :f_in].set(shift)
        w_p = jnp.zeros((f_in_p, f_out_p), jnp.float32).at[:f_in, :f_out].set(w_t)
        b_p = jnp.zeros((1, f_out_p), jnp.float32).at[0, :f_out].set(b)

        flat_args += [scale_p, shift_p, w_p, b_p]
        in_specs += [
            pl.BlockSpec((1, f_in_p), lambda i: (0, 0)),
            pl.BlockSpec((1, f_in_p), lambda i: (0, 0)),
            pl.BlockSpec((f_in_p, f_out_p), lambda i: (0, 0)),
            pl.BlockSpec((1, f_out_p), lambda i: (0, 0)),
        ]
        flops += 2 * n_pad * f_in_p * f_out_p + 3 * n_pad * f_in_p

    out_pad = dims_pad[-1]
    grid = (n_pad // block_rows,)
    bytes_accessed = sum(int(a.size) * 4 for a in flat_args) + n_pad * out_pad * 4

    out = pl.pallas_call(
        _make_mlp_kernel(num_layers),
        out_shape=jax.ShapeDtypeStruct((n_pad, out_pad), jnp.float32),
        grid_spec=pltpu.PrefetchScalarGridSpec(
            num_scalar_prefetch=0,
            grid=grid,
            in_specs=in_specs,
            out_specs=pl.BlockSpec((block_rows, out_pad), lambda i: (i, 0)),
        ),
        compiler_params=pltpu.CompilerParams(
            dimension_semantics=("parallel",),      # rows independent -> megacore on v7x
            vmem_limit_bytes=32 * 1024 * 1024,      # explicit, safe on v5e/v6e/v7x
        ),
        cost_estimate=pl.CostEstimate(
            flops=flops, transcendentals=0, bytes_accessed=bytes_accessed),
    )(*flat_args)

    # Strip row / lane padding outside the kernel.
    return out[:n, :dims[-1]]


def reference_mlp(x, layer_params):
    h = x.astype(jnp.float32)
    for li, p in enumerate(layer_params):
        inv_std = 1.0 / jnp.sqrt(p["var"] + p["eps"])
        h = (h - p["mean"]) * inv_std * p["gamma"] + p["beta"]
        if li > 0:
            h = jnp.maximum(h, 0.0)
        h = h @ p["weight"].T + p["bias"]
    return h


if __name__ == "__main__":
    key = jax.random.PRNGKey(0)

    # MLP(in_dim=96, out_dims=[192, 80], batch_norm=True, dropout=0), eval mode.
    batch = 300
    in_dim = 96
    out_dims = [192, 80]
    dims = [in_dim] + out_dims

    params = []
    for li in range(len(out_dims)):
        key, kw, kb, kg, kbe, km, kv = jax.random.split(key, 7)
        f_in, f_out = dims[li], dims[li + 1]
        bound = 1.0 / math.sqrt(f_in)
        params.append(dict(
            weight=jax.random.uniform(kw, (f_out, f_in), minval=-bound, maxval=bound,
                                      dtype=jnp.float32),
            bias=jax.random.uniform(kb, (f_out,), minval=-bound, maxval=bound,
                                    dtype=jnp.float32),
            gamma=jax.random.uniform(kg, (f_in,), minval=0.5, maxval=1.5, dtype=jnp.float32),
            beta=0.1 * jax.random.normal(kbe, (f_in,), dtype=jnp.float32),
            mean=0.1 * jax.random.normal(km, (f_in,), dtype=jnp.float32),
            var=jax.random.uniform(kv, (f_in,), minval=0.5, maxval=1.5, dtype=jnp.float32),
            eps=1e-5,
        ))

    key, kx = jax.random.split(key)
    x = jax.random.normal(kx, (batch, in_dim), dtype=jnp.float32)

    out = mlp_forward(x, params)
    out = jax.block_until_ready(out)

    ref = reference_mlp(x, params)
    assert out.shape == (batch, out_dims[-1]), out.shape
    max_err = float(jnp.max(jnp.abs(out - ref)))
    assert jnp.allclose(out, ref, atol=2e-3, rtol=2e-3), f"mismatch vs reference: {max_err}"

    print("KERNEL_OK")
</pallas_src>

<mosaic_0001>
module attributes {stable_mosaic.version = 11 : i64} {
  func.func @kernel(%arg0: i32, %arg1: memref<128x128xf32, #tpu.memory_space<vmem>>, %arg2: memref<1x128xf32, #tpu.memory_space<vmem>>, %arg3: memref<1x128xf32, #tpu.memory_space<vmem>>, %arg4: memref<128x256xf32, #tpu.memory_space<vmem>>, %arg5: memref<1x256xf32, #tpu.memory_space<vmem>>, %arg6: memref<1x256xf32, #tpu.memory_space<vmem>>, %arg7: memref<1x256xf32, #tpu.memory_space<vmem>>, %arg8: memref<256x128xf32, #tpu.memory_space<vmem>>, %arg9: memref<1x128xf32, #tpu.memory_space<vmem>>, %arg10: memref<128x128xf32, #tpu.memory_space<vmem>>) attributes {dimension_semantics = [#tpu.dimension_semantics<parallel>], iteration_bounds = array<i64: 3>, scalar_prefetch = 0 : i64, scratch_operands = 0 : i64, tpu.core_type = #tpu.core_type<tc>, window_params = [{transform_indices = @transform_0, window_bounds = array<i64: 128, 128>}, {pipeline_mode = #tpu.pipeline_mode<synchronous>, transform_indices = @transform_1, window_bounds = array<i64: 1, 128>}, {pipeline_mode = #tpu.pipeline_mode<synchronous>, transform_indices = @transform_2, window_bounds = array<i64: 1, 128>}, {pipeline_mode = #tpu.pipeline_mode<synchronous>, transform_indices = @transform_3, window_bounds = array<i64: 128, 256>}, {pipeline_mode = #tpu.pipeline_mode<synchronous>, transform_indices = @transform_4, window_bounds = array<i64: 1, 256>}, {pipeline_mode = #tpu.pipeline_mode<synchronous>, transform_indices = @transform_5, window_bounds = array<i64: 1, 256>}, {pipeline_mode = #tpu.pipeline_mode<synchronous>, transform_indices = @transform_6, window_bounds = array<i64: 1, 256>}, {pipeline_mode = #tpu.pipeline_mode<synchronous>, transform_indices = @transform_7, window_bounds = array<i64: 256, 128>}, {pipeline_mode = #tpu.pipeline_mode<synchronous>, transform_indices = @transform_8, window_bounds = array<i64: 1, 128>}, {transform_indices = @transform_9, window_bounds = array<i64: 128, 128>}]} {
    %c0 = arith.constant 0 : index
    %c0_0 = arith.constant 0 : index
    %0 = vector.load %arg1[%c0, %c0_0] : memref<128x128xf32, #tpu.memory_space<vmem>>, vector<128x128xf32>
    %c0_1 = arith.constant 0 : index
    %c0_2 = arith.constant 0 : index
    %1 = vector.load %arg2[%c0_1, %c0_2] : memref<1x128xf32, #tpu.memory_space<vmem>>, vector<1x128xf32>
    %2 = vector.broadcast %1 : vector<1x128xf32> to vector<128x128xf32>
    %3 = arith.mulf %0, %2 : vector<128x128xf32>
    %c0_3 = arith.constant 0 : index
    %c0_4 = arith.constant 0 : index
    %4 = vector.load %arg3[%c0_3, %c0_4] : memref<1x128xf32, #tpu.memory_space<vmem>>, vector<1x128xf32>
    %5 = vector.broadcast %4 : vector<1x128xf32> to vector<128x128xf32>
    %6 = arith.addf %3, %5 : vector<128x128xf32>
    %c0_5 = arith.constant 0 : index
    %c0_6 = arith.constant 0 : index
    %7 = vector.load %arg4[%c0_5, %c0_6] : memref<128x256xf32, #tpu.memory_space<vmem>>, vector<128x256xf32>
    %cst = arith.constant dense<0.000000e+00> : vector<128x256xf32>
    %8 = tpu.matmul %6, %7, %cst {dimension_numbers = #tpu.dot_dimension_numbers<[1], [0], [0], [1], [0, 0, 1, 1], [], []>} : vector<128x128xf32>, vector<128x256xf32>, vector<128x256xf32> -> vector<128x256xf32>
    %c0_7 = arith.constant 0 : index
    %c0_8 = arith.constant 0 : index
    %9 = vector.load %arg5[%c0_7, %c0_8] : memref<1x256xf32, #tpu.memory_space<vmem>>, vector<1x256xf32>
    %10 = vector.broadcast %9 : vector<1x256xf32> to vector<128x256xf32>
    %11 = arith.addf %8, %10 : vector<128x256xf32>
    %c0_9 = arith.constant 0 : index
    %c0_10 = arith.constant 0 : index
    %12 = vector.load %arg6[%c0_9, %c0_10] : memref<1x256xf32, #tpu.memory_space<vmem>>, vector<1x256xf32>
    %13 = vector.broadcast %12 : vector<1x256xf32> to vector<128x256xf32>
    %14 = arith.mulf %11, %13 : vector<128x256xf32>
    %c0_11 = arith.constant 0 : index
    %c0_12 = arith.constant 0 : index
    %15 = vector.load %arg7[%c0_11, %c0_12] : memref<1x256xf32, #tpu.memory_space<vmem>>, vector<1x256xf32>
    %16 = vector.broadcast %15 : vector<1x256xf32> to vector<128x256xf32>
    %17 = arith.addf %14, %16 : vector<128x256xf32>
    %cst_13 = arith.constant 0.000000e+00 : f32
    %18 = vector.broadcast %cst_13 : f32 to vector<128x256xf32>
    %19 = arith.maximumf %17, %18 : vector<128x256xf32>
    %c0_14 = arith.constant 0 : index
    %c0_15 = arith.constant 0 : index
    %20 = vector.load %arg8[%c0_14, %c0_15] : memref<256x128xf32, #tpu.memory_space<vmem>>, vector<256x128xf32>
    %cst_16 = arith.constant dense<0.000000e+00> : vector<128x128xf32>
    %21 = tpu.matmul %19, %20, %cst_16 {dimension_numbers = #tpu.dot_dimension_numbers<[1], [0], [0], [1], [0, 0, 1, 1], [], []>} : vector<128x256xf32>, vector<256x128xf32>, vector<128x128xf32> -> vector<128x128xf32>
    %c0_17 = arith.constant 0 : index
    %c0_18 = arith.constant 0 : index
    %22 = vector.load %arg9[%c0_17, %c0_18] : memref<1x128xf32, #tpu.memory_space<vmem>>, vector<1x128xf32>
    %23 = vector.broadcast %22 : vector<1x128xf32> to vector<128x128xf32>
    %24 = arith.addf %21, %23 : vector<128x128xf32>
    %c0_19 = arith.constant 0 : index
    %c0_20 = arith.constant 0 : index
    %25 = vector.load %arg10[%c0_19, %c0_20] : memref<128x128xf32, #tpu.memory_space<vmem>>, vector<128x128xf32>
    tpu.vector_store %arg10[%c0_19, %c0_20], %24 {strides = array<i32>} : memref<128x128xf32, #tpu.memory_space<vmem>>, vector<128x128xf32>,
    return
  }
  func.func @transform_0(%arg0: i32) -> (i32, i32) {
    %c0_i32 = arith.constant 0 : i32
    %c0_i32_0 = arith.constant 0 : i32
    return %arg0, %c0_i32 : i32, i32
  }
  func.func @transform_1(%arg0: i32) -> (i32, i32) {
    %c0_i32 = arith.constant 0 : i32
    %c0_i32_0 = arith.constant 0 : i32
    %c0_i32_1 = arith.constant 0 : i32
    return %c0_i32, %c0_i32_0 : i32, i32
  }
  func.func @transform_2(%arg0: i32) -> (i32, i32) {
    %c0_i32 = arith.constant 0 : i32
    %c0_i32_0 = arith.constant 0 : i32
    %c0_i32_1 = arith.constant 0 : i32
    return %c0_i32, %c0_i32_0 : i32, i32
  }
  func.func @transform_3(%arg0: i32) -> (i32, i32) {
    %c0_i32 = arith.constant 0 : i32
    %c0_i32_0 = arith.constant 0 : i32
    %c0_i32_1 = arith.constant 0 : i32
    return %c0_i32, %c0_i32_0 : i32, i32
  }
  func.func @transform_4(%arg0: i32) -> (i32, i32) {
    %c0_i32 = arith.constant 0 : i32
    %c0_i32_0 = arith.constant 0 : i32
    %c0_i32_1 = arith.constant 0 : i32
    return %c0_i32, %c0_i32_0 : i32, i32
  }
  func.func @transform_5(%arg0: i32) -> (i32, i32) {
    %c0_i32 = arith.constant 0 : i32
    %c0_i32_0 = arith.constant 0 : i32
    %c0_i32_1 = arith.constant 0 : i32
    return %c0_i32, %c0_i32_0 : i32, i32
  }
  func.func @transform_6(%arg0: i32) -> (i32, i32) {
    %c0_i32 = arith.constant 0 : i32
    %c0_i32_0 = arith.constant 0 : i32
    %c0_i32_1 = arith.constant 0 : i32
    return %c0_i32, %c0_i32_0 : i32, i32
  }
  func.func @transform_7(%arg0: i32) -> (i32, i32) {
    %c0_i32 = arith.constant 0 : i32
    %c0_i32_0 = arith.constant 0 : i32
    %c0_i32_1 = arith.constant 0 : i32
    return %c0_i32, %c0_i32_0 : i32, i32
  }
  func.func @transform_8(%arg0: i32) -> (i32, i32) {
    %c0_i32 = arith.constant 0 : i32
    %c0_i32_0 = arith.constant 0 : i32
    %c0_i32_1 = arith.constant 0 : i32
    return %c0_i32, %c0_i32_0 : i32, i32
  }
  func.func @transform_9(%arg0: i32) -> (i32, i32) {
    %c0_i32 = arith.constant 0 : i32
    %c0_i32_0 = arith.constant 0 : i32
    return %arg0, %c0_i32 : i32, i32
  }
}

</mosaic_0001>

<llo_original>
// kernel: tpu_custom_call.1
$region0: #{tpu_custom_call.1}
  #allocation0 [shape = 'u32[]', space=smem, size = 0x4, offset = 0x4, fixed_abs, tag = 'smem constant byte address 0x4 - core index']
  #allocation1 [shape = 'u32[144,128]{1,0:T(1,128)}', space=vmem, size = 0x12000, scoped, tag = 'internal scratch']
  %s0 = inlined_call_operand.hbm [shape: f32[384,128], index: 0, kind: input, shape index: {}]
  %s1 = inlined_call_operand.vmem [shape: f32[1,128], index: 1, kind: input, shape index: {}]
  %s2 = inlined_call_operand.hbm [shape: f32[1,128], index: 2, kind: input, shape index: {}]
  %s3 = inlined_call_operand.hbm [shape: f32[128,256], index: 3, kind: input, shape index: {}]
  %s4 = inlined_call_operand.vmem [shape: f32[1,256], index: 4, kind: input, shape index: {}]
  %s5 = inlined_call_operand.vmem [shape: f32[1,256], index: 5, kind: input, shape index: {}]
  %s6 = inlined_call_operand.vmem [shape: f32[1,256], index: 6, kind: input, shape index: {}]
  %s7 = inlined_call_operand.hbm [shape: f32[256,128], index: 7, kind: input, shape index: {}]
  %s8 = inlined_call_operand.vmem [shape: f32[1,128], index: 8, kind: input, shape index: {}]
  %s9 = inlined_call_operand.hbm [shape: f32[384,128], index: 9, kind: output, shape index: {}]
  %s10 = sld [smem:[#allocation0]]
  $region85: #{tpu_custom_call.1} parent=0
    _
  %s12 = ssub.s32 1, %s10
  %s13 = scalar_select 0, %s12, %s10
  $region1: #{tpu_custom_call.1} parent=0
    #allocation2 [shape = 'u8[131072]{0}', space=vmem, size = 0x20000, scoped, tag = 'input window, operand 0']
    #allocation3 [shape = 's32[2]{0}', space=sflag, size = 0x8, scoped, tag = 'scoped memory for tpu_custom_call.1']
    #allocation4 [shape = 's32[2]{0}', space=sflag, size = 0x8, scoped, tag = 'scoped memory for tpu_custom_call.1']
    #allocation5 [shape = 'u8[512]{0}', space=vmem, size = 0x400, scoped, tag = 'input window, operand 2, single buffered']
    #allocation6 [shape = 's32[1]{0}', space=sflag, size = 0x4, scoped, tag = 'scoped memory for tpu_custom_call.1']
    #allocation7 [shape = 'u8[131072]{0}', space=vmem, size = 0x20000, scoped, tag = 'input window, operand 3, single buffered']
    #allocation8 [shape = 'u8[131072]{0}', space=vmem, size = 0x20000, scoped, tag = 'input window, operand 7, single buffered']
    #allocation9 [shape = 's32[1]{0}', space=sflag, size = 0x4, scoped, tag = 'scoped memory for tpu_custom_call.1']
    #allocation10 [shape = 'u8[131072]{0}', space=vmem, size = 0x20000, scoped, tag = 'output window, operand 0']
    %14 = vsyncpa [#allocation3], 0
    %s15 = scalar_lea.sflag [#allocation3], 1
    %16 = vsyncpa %s15, 0
    %17 = vsyncpa [#allocation6], 0
    %18 = vsyncpa [#allocation9], 0
    %19 = vsyncpa [#allocation4], 0
    %s20 = scalar_lea.sflag [#allocation4], 1
    %21 = vsyncpa %s20, 0
    loop: start=0, step=1, limit=5
    $region2: #{tpu_custom_call.1} parent=1 // loop_pre_header
      _
    $region3: #{tpu_custom_call.1} parent=1 // loop_header
      %s23 = sphi 0, %s27
      %p24 = scmp.ge.s32.totalorder %s23, 5
      %s33 = sphi 0, %s35
      %s36 = sphi 0, %s33
      %s37 = sphi 0, %s36
      %s53 = sphi 0, %s37
      %s57 = sphi 0, %s57
      %s59 = sphi 0, %s57
      %s60 = sphi 0, %s59
      %s74 = sphi 0, %s60
      %s78 = sphi 0, %s78
      %s80 = sphi 0, %s78
      %s81 = sphi 0, %s80
      %s95 = sphi 0, %s81
      %s99 = sphi 0, %s99
      %s101 = sphi 0, %s99
      %s102 = sphi 0, %s101
      %s116 = sphi 0, %s102
      %s120 = sphi 0, %s120
      %s122 = sphi 0, %s120
      %s123 = sphi 0, %s122
      %s137 = sphi 0, %s123
      %s141 = sphi 0, %s141
      %s143 = sphi 0, %s141
      %s144 = sphi 0, %s143
      %s158 = sphi 0, %s144
      %s162 = sphi 0, %s162
      %s164 = sphi 0, %s162
      %s165 = sphi 0, %s164
      %s179 = sphi 0, %s165
      %s183 = sphi 0, %s183
      %s185 = sphi 0, %s183
      %s186 = sphi 0, %s185
      %s200 = sphi 0, %s186
      %s204 = sphi 0, %s204
      %s206 = sphi 0, %s204
      %s207 = sphi 0, %s206
      %s221 = sphi 0, %s207
      %s227 = sphi 0, %s229
      %s230 = sphi 0, %s227
      %s231 = sphi 0, %s230
      %s247 = sphi 0, %s231
    $region4: #{tpu_custom_call.1} parent=1 // loop_header_branch
      %26 = sbr.rel (%p24) target = $region8
    $region5: #{tpu_custom_call.1} parent=1 // loop_body
      %s28 = ssub.s32 %s23, 1
      %s29 = ssub.s32 %s23, 2
      %s30 = sadd.s32 %s23, 1
      %s31 = ssub.s32 %s23, %s30
      %p32 = scmp.eq.s32.totalorder %s31, 0
      %s34 = sadd.s32 %s33, 1
      %s35 = scalar_select %p32, %s33, %s34
      %p38 = pneg %p32
      %p39 = scmp.eq.s32.totalorder %s23, 2
      %p40 = por %p38, %p39
      %p41 = scmp.ne.s32.totalorder %s33, %s36
      %p42 = scmp.eq.s32.totalorder %s23, 0
      %p43 = por %p41, %p42
      %p44 = scmp.ne.s32.totalorder %s33, %s36
      %p45 = scmp.eq.s32.totalorder %s28, 2
      %p46 = por %p44, %p45
      %p47 = scmp.ne.s32.totalorder %s36, %s37
      %p48 = scmp.eq.s32.totalorder %s28, 0
      %p49 = por %p47, %p48
      %p50 = scmp.ne.s32.totalorder %s36, %s37
      %p51 = scmp.eq.s32.totalorder %s29, 2
      %p52 = por %p50, %p51
      %p54 = scmp.ne.s32.totalorder %s37, %s53
      %p55 = scmp.eq.s32.totalorder %s29, 0
      %p56 = por %p54, %p55
      %s58 = sadd.s32 %s57, 1
      %p61 = scmp.eq.s32.totalorder %s23, 2
      %p62 = scmp.ne.s32.totalorder %s57, %s59
      %p63 = scmp.eq.s32.totalorder %s23, 0
      %p64 = por %p62, %p63
      %p65 = scmp.ne.s32.totalorder %s57, %s59
      %p66 = scmp.eq.s32.totalorder %s28, 2
      %p67 = por %p65, %p66
      %p68 = scmp.ne.s32.totalorder %s59, %s60
      %p69 = scmp.eq.s32.totalorder %s28, 0
      %p70 = por %p68, %p69
      %p71 = scmp.ne.s32.totalorder %s59, %s60
      %p72 = scmp.eq.s32.totalorder %s29, 2
      %p73 = por %p71, %p72
      %p75 = scmp.ne.s32.totalorder %s60, %s74
      %p76 = scmp.eq.s32.totalorder %s29, 0
      %p77 = por %p75, %p76
      %s79 = sadd.s32 %s78, 1
      %p82 = scmp.eq.s32.totalorder %s23, 2
      %p83 = scmp.ne.s32.totalorder %s78, %s80
      %p84 = scmp.eq.s32.totalorder %s23, 0
      %p85 = por %p83, %p84
      %p86 = scmp.ne.s32.totalorder %s78, %s80
      %p87 = scmp.eq.s32.totalorder %s28, 2
      %p88 = por %p86, %p87
      %p89 = scmp.ne.s32.totalorder %s80, %s81
      %p90 = scmp.eq.s32.totalorder %s28, 0
      %p91 = por %p89, %p90
      %p92 = scmp.ne.s32.totalorder %s80, %s81
      %p93 = scmp.eq.s32.totalorder %s29, 2
      %p94 = por %p92, %p93
      %p96 = scmp.ne.s32.totalorder %s81, %s95
      %p97 = scmp.eq.s32.totalorder %s29, 0
      %p98 = por %p96, %p97
      %s100 = sadd.s32 %s99, 1
      %p103 = scmp.eq.s32.totalorder %s23, 2
      %p104 = scmp.ne.s32.totalorder %s99, %s101
      %p105 = scmp.eq.s32.totalorder %s23, 0
      %p106 = por %p104, %p105
      %p107 = scmp.ne.s32.totalorder %s99, %s101
      %p108 = scmp.eq.s32.totalorder %s28, 2
      %p109 = por %p107, %p108
      %p110 = scmp.ne.s32.totalorder %s101, %s102
      %p111 = scmp.eq.s32.totalorder %s28, 0
      %p112 = por %p110, %p111
      %p113 = scmp.ne.s32.totalorder %s101, %s102
      %p114 = scmp.eq.s32.totalorder %s29, 2
      %p115 = por %p113, %p114
      %p117 = scmp.ne.s32.totalorder %s102, %s116
      %p118 = scmp.eq.s32.totalorder %s29, 0
      %p119 = por %p117, %p118
      %s121 = sadd.s32 %s120, 1
      %p124 = scmp.eq.s32.totalorder %s23, 2
      %p125 = scmp.ne.s32.totalorder %s120, %s122
      %p126 = scmp.eq.s32.totalorder %s23, 0
      %p127 = por %p125, %p126
      %p128 = scmp.ne.s32.totalorder %s120, %s122
      %p129 = scmp.eq.s32.totalorder %s28, 2
      %p130 = por %p128, %p129
      %p131 = scmp.ne.s32.totalorder %s122, %s123
      %p132 = scmp.eq.s32.totalorder %s28, 0
      %p133 = por %p131, %p132
      %p134 = scmp.ne.s32.totalorder %s122, %s123
      %p135 = scmp.eq.s32.totalorder %s29, 2
      %p136 = por %p134, %p135
      %p138 = scmp.ne.s32.totalorder %s123, %s137
      %p139 = scmp.eq.s32.totalorder %s29, 0
      %p140 = por %p138, %p139
      %s142 = sadd.s32 %s141, 1
      %p145 = scmp.eq.s32.totalorder %s23, 2
      %p146 = scmp.ne.s32.totalorder %s141, %s143
      %p147 = scmp.eq.s32.totalorder %s23, 0
      %p148 = por %p146, %p147
      %p149 = scmp.ne.s32.totalorder %s141, %s143
      %p150 = scmp.eq.s32.totalorder %s28, 2
      %p151 = por %p149, %p150
      %p152 = scmp.ne.s32.totalorder %s143, %s144
      %p153 = scmp.eq.s32.totalorder %s28, 0
      %p154 = por %p152, %p153
      %p155 = scmp.ne.s32.totalorder %s143, %s144
      %p156 = scmp.eq.s32.totalorder %s29, 2
      %p157 = por %p155, %p156
      %p159 = scmp.ne.s32.totalorder %s144, %s158
      %p160 = scmp.eq.s32.totalorder %s29, 0
      %p161 = por %p159, %p160
      %s163 = sadd.s32 %s162, 1
      %p166 = scmp.eq.s32.totalorder %s23, 2
      %p167 = scmp.ne.s32.totalorder %s162, %s164
      %p168 = scmp.eq.s32.totalorder %s23, 0
      %p169 = por %p167, %p168
      %p170 = scmp.ne.s32.totalorder %s162, %s164
      %p171 = scmp.eq.s32.totalorder %s28, 2
      %p172 = por %p170, %p171
      %p173 = scmp.ne.s32.totalorder %s164, %s165
      %p174 = scmp.eq.s32.totalorder %s28, 0
      %p175 = por %p173, %p174
      %p176 = scmp.ne.s32.totalorder %s164, %s165
      %p177 = scmp.eq.s32.totalorder %s29, 2
      %p178 = por %p176, %p177
      %p180 = scmp.ne.s32.totalorder %s165, %s179
      %p181 = scmp.eq.s32.totalorder %s29, 0
      %p182 = por %p180, %p181
      %s184 = sadd.s32 %s183, 1
      %p187 = scmp.eq.s32.totalorder %s23, 2
      %p188 = scmp.ne.s32.totalorder %s183, %s185
      %p189 = scmp.eq.s32.totalorder %s23, 0
      %p190 = por %p188, %p189
      %p191 = scmp.ne.s32.totalorder %s183, %s185
      %p192 = scmp.eq.s32.totalorder %s28, 2
      %p193 = por %p191, %p192
      %p194 = scmp.ne.s32.totalorder %s185, %s186
      %p195 = scmp.eq.s32.totalorder %s28, 0
      %p196 = por %p194, %p195
      %p197 = scmp.ne.s32.totalorder %s185, %s186
      %p198 = scmp.eq.s32.totalorder %s29, 2
      %p199 = por %p197, %p198
      %p201 = scmp.ne.s32.totalorder %s186, %s200
      %p202 = scmp.eq.s32.totalorder %s29, 0
      %p203 = por %p201, %p202
      %s205 = sadd.s32 %s204, 1
      %p208 = scmp.eq.s32.totalorder %s23, 2
      %p209 = scmp.ne.s32.totalorder %s204, %s206
      %p210 = scmp.eq.s32.totalorder %s23, 0
      %p211 = por %p209, %p210
      %p212 = scmp.ne.s32.totalorder %s204, %s206
      %p213 = scmp.eq.s32.totalorder %s28, 2
      %p214 = por %p212, %p213
      %p215 = scmp.ne.s32.totalorder %s206, %s207
      %p216 = scmp.eq.s32.totalorder %s28, 0
      %p217 = por %p215, %p216
      %p218 = scmp.ne.s32.totalorder %s206, %s207
      %p219 = scmp.eq.s32.totalorder %s29, 2
      %p220 = por %p218, %p219
      %p222 = scmp.ne.s32.totalorder %s207, %s221
      %p223 = scmp.eq.s32.totalorder %s29, 0
      %p224 = por %p222, %p223
      %s225 = ssub.s32 %s23, %s30
      %p226 = scmp.eq.s32.totalorder %s225, 0
      %s228 = sadd.s32 %s227, 1
      %s229 = scalar_select %p226, %s227, %s228
      %p232 = pneg %p226
      %p233 = scmp.eq.s32.totalorder %s23, 2
      %p234 = por %p232, %p233
      %p235 = scmp.ne.s32.totalorder %s227, %s230
      %p236 = scmp.eq.s32.totalorder %s23, 0
      %p237 = por %p235, %p236
      %p238 = scmp.ne.s32.totalorder %s227, %s230
      %p239 = scmp.eq.s32.totalorder %s28, 2
      %p240 = por %p238, %p239
      %p241 = scmp.ne.s32.totalorder %s230, %s231
      %p242 = scmp.eq.s32.totalorder %s28, 0
      %p243 = por %p241, %p242
      %p244 = scmp.ne.s32.totalorder %s230, %s231
      %p245 = scmp.eq.s32.totalorder %s29, 2
      %p246 = por %p244, %p245
      %p248 = scmp.ne.s32.totalorder %s231, %s247
      %p249 = scmp.eq.s32.totalorder %s29, 0
      %p250 = por %p248, %p249
      %p251 = scmp.le.s32.totalorder 1, %s23
      %p252 = scmp.lt.s32.totalorder %s23, 4
      %p253 = pnand %p251, %p252
      %p254 = pneg %p253
      // Predicated region
      $region9: #{tpu_custom_call.1} parent=5 // pred_check
        _
      $region10: #{tpu_custom_call.1} parent=5 // pred_check_branch
        %256 = sbr.rel (%p253) target = $region12
      $region11: #{tpu_custom_call.1} parent=5 // pred_region
        %s257 = ssub.s32 %s23, 1
        // Predicated region
        $region13: #{tpu_custom_call.1} parent=11 // pred_check
          %p258 = pneg %p70
        $region14: #{tpu_custom_call.1} parent=11 // pred_check_branch
          %260 = sbr.rel (%p258) target = $region16
        $region15: #{tpu_custom_call.1} parent=11 // pred_region
          _
        $region16: #{tpu_custom_call.1} parent=11 // pred_fallthru
          _
        // Predicated region
        $region17: #{tpu_custom_call.1} parent=11 // pred_check
          %p261 = pneg %p91
        $region18: #{tpu_custom_call.1} parent=11 // pred_check_branch
          %263 = sbr.rel (%p261) target = $region20
        $region19: #{tpu_custom_call.1} parent=11 // pred_region
          %s265 = ssub.s32 16, 16
          %266 = vsyncadd [#allocation6], %s265
          %s268 = sshll.u32 [#allocation5], 4
          %s269 = int_to_ptr.vmem [resolvable:$true] %s268
          %271 = dma.hbm_to_vmem [thread:$0]  %s2, 16, %s269, [#allocation6]
        $region20: #{tpu_custom_call.1} parent=11 // pred_fallthru
          _
        // Predicated region
        $region21: #{tpu_custom_call.1} parent=11 // pred_check
          %p272 = pneg %p112
        $region22: #{tpu_custom_call.1} parent=11 // pred_check_branch
          %274 = sbr.rel (%p272) target = $region24
        $region23: #{tpu_custom_call.1} parent=11 // pred_region
          %s276 = ssub.s32 4096, 4096
          %277 = vsyncadd [#allocation6], %s276
          %s278 = sshll.u32 [#allocation7], 4
          %s279 = int_to_ptr.vmem [resolvable:$true] %s278
          %284 = dma.hbm_to_vmem [thread:$0]  %s3, 4096, %s279, [#allocation6], 256, 256, 16
        $region24: #{tpu_custom_call.1} parent=11 // pred_fallthru
          _
        // Predicated region
        $region25: #{tpu_custom_call.1} parent=11 // pred_check
          %p285 = pneg %p133
        $region26: #{tpu_custom_call.1} parent=11 // pred_check_branch
          %287 = sbr.rel (%p285) target = $region28
        $region27: #{tpu_custom_call.1} parent=11 // pred_region
          _
        $region28: #{tpu_custom_call.1} parent=11 // pred_fallthru
          _
        // Predicated region
        $region29: #{tpu_custom_call.1} parent=11 // pred_check
          %p288 = pneg %p154
        $region30: #{tpu_custom_call.1} parent=11 // pred_check_branch
          %290 = sbr.rel (%p288) target = $region32
        $region31: #{tpu_custom_call.1} parent=11 // pred_region
          _
        $region32: #{tpu_custom_call.1} parent=11 // pred_fallthru
          _
        // Predicated region
        $region33: #{tpu_custom_call.1} parent=11 // pred_check
          %p291 = pneg %p175
        $region34: #{tpu_custom_call.1} parent=11 // pred_check_branch
          %293 = sbr.rel (%p291) target = $region36
        $region35: #{tpu_custom_call.1} parent=11 // pred_region
          _
        $region36: #{tpu_custom_call.1} parent=11 // pred_fallthru
          _
        // Predicated region
        $region37: #{tpu_custom_call.1} parent=11 // pred_check
          %p294 = pneg %p196
        $region38: #{tpu_custom_call.1} parent=11 // pred_check_branch
          %296 = sbr.rel (%p294) target = $region40
        $region39: #{tpu_custom_call.1} parent=11 // pred_region
          %s298 = ssub.s32 4096, 4096
          %299 = vsyncadd [#allocation9], %s298
          %s300 = sshll.u32 [#allocation8], 4
          %s301 = int_to_ptr.vmem [resolvable:$true] %s300
          %306 = dma.hbm_to_vmem [thread:$0]  %s7, 4096, %s301, [#allocation9], 128, 128, 8
        $region40: #{tpu_custom_call.1} parent=11 // pred_fallthru
          _
        // Predicated region
        $region41: #{tpu_custom_call.1} parent=11 // pred_check
          %p307 = pneg %p217
        $region42: #{tpu_custom_call.1} parent=11 // pred_check_branch
          %309 = sbr.rel (%p307) target = $region44
        $region43: #{tpu_custom_call.1} parent=11 // pred_region
          _
        $region44: #{tpu_custom_call.1} parent=11 // pred_fallthru
          _
      $region12: #{tpu_custom_call.1} parent=5 // pred_fallthru
        _
      %p310 = scmp.lt.s32.totalorder %s23, 3
      // Predicated region
      $region45: #{tpu_custom_call.1} parent=5 // pred_check
        %p311 = pneg %p310
      $region46: #{tpu_custom_call.1} parent=5 // pred_check_branch
        %313 = sbr.rel (%p311) target = $region48
      $region47: #{tpu_custom_call.1} parent=5 // pred_region
        // Predicated region
        $region49: #{tpu_custom_call.1} parent=47 // pred_check
          %p314 = pneg %p43
        $region50: #{tpu_custom_call.1} parent=47 // pred_check_branch
          %316 = sbr.rel (%p314) target = $region52
        $region51: #{tpu_custom_call.1} parent=47 // pred_region
          %s317 = sand.u32 %s33, 1
          %s318 = scalar_lea.sflag [#allocation3], %s317
          %s319 = sand.u32 %s33, 1
          %s320 = smul.addr %s319, 128
          %s321 = scalar_lea.vmem [#allocation2], %s320
          %s322 = smul.u32 16, %s23
          %s324 = ssub.s32 2048, 2048
          %325 = vsyncadd %s318, %s324
          %s326 = smul.addr %s322, 128
          %s327 = scalar_lea.hbm %s0, %s326
          %s328 = sshll.u32 %s321, 4
          %s329 = int_to_ptr.vmem [resolvable:$true] %s328
          %334 = dma.hbm_to_vmem [thread:$0]  %s327, 2048, %s329, %s318, 128, 128, 8
        $region52: #{tpu_custom_call.1} parent=47 // pred_fallthru
          _
      $region48: #{tpu_custom_call.1} parent=5 // pred_fallthru
        _
      %p335 = scmp.le.s32.totalorder 1, %s23
      %p336 = scmp.lt.s32.totalorder %s23, 4
      %p337 = pnand %p335, %p336
      %p338 = pneg %p337
      // Predicated region
      $region53: #{tpu_custom_call.1} parent=5 // pred_check
        _
      $region54: #{tpu_custom_call.1} parent=5 // pred_check_branch
        %340 = sbr.rel (%p337) target = $region56
      $region55: #{tpu_custom_call.1} parent=5 // pred_region
        %s341 = ssub.s32 %s23, 1
        %s342 = sand.u32 %s36, 1
        %s343 = scalar_lea.sflag [#allocation3], %s342
        %s344 = sand.u32 %s36, 1
        %s345 = smul.addr %s344, 128
        %s346 = scalar_lea.vmem [#allocation2], %s345
        // Predicated region
        $region57: #{tpu_custom_call.1} parent=55 // pred_check
          %p347 = pneg %p49
        $region58: #{tpu_custom_call.1} parent=55 // pred_check_branch
          %349 = sbr.rel (%p347) target = $region60
        $region59: #{tpu_custom_call.1} parent=55 // pred_region
          %350 = dma.done %s343, 2048
        $region60: #{tpu_custom_call.1} parent=55 // pred_fallthru
          _
        // Predicated region
        $region61: #{tpu_custom_call.1} parent=55 // pred_check
          %p351 = pneg %p91
        $region62: #{tpu_custom_call.1} parent=55 // pred_check_branch
          %353 = sbr.rel (%p351) target = $region64
        $region63: #{tpu_custom_call.1} parent=55 // pred_region
          %354 = dma.done [#allocation6], 16
        $region64: #{tpu_custom_call.1} parent=55 // pred_fallthru
          _
        // Predicated region
        $region65: #{tpu_custom_call.1} parent=55 // pred_check
          %p355 = pneg %p112
        $region66: #{tpu_custom_call.1} parent=55 // pred_check_branch
          %357 = sbr.rel (%p355) target = $region68
        $region67: #{tpu_custom_call.1} parent=55 // pred_region
          %358 = dma.done [#allocation6], 4096
        $region68: #{tpu_custom_call.1} parent=55 // pred_fallthru
          _
        // Predicated region
        $region69: #{tpu_custom_call.1} parent=55 // pred_check
          %p359 = pneg %p196
        $region70: #{tpu_custom_call.1} parent=55 // pred_check_branch
          %361 = sbr.rel (%p359) target = $region72
        $region71: #{tpu_custom_call.1} parent=55 // pred_region
          %362 = dma.done [#allocation9], 4096
        $region72: #{tpu_custom_call.1} parent=55 // pred_fallthru
          _
        %s363 = sand.u32 %s36, 1
        %s364 = scalar_lea.sflag [#allocation3], %s363
        %s365 = sand.u32 %s36, 1
        %s366 = smul.addr %s365, 128
        %s367 = scalar_lea.vmem [#allocation2], %s366
        %p368 = pneg %p49
        %p369 = pneg %p46
        %p370 = pneg %p70
        %p371 = pneg %p67
        %p372 = pneg %p91
        %p373 = pneg %p88
        %p374 = pneg %p112
        %p375 = pneg %p109
        %p376 = pneg %p133
        %p377 = pneg %p130
        %p378 = pneg %p154
        %p379 = pneg %p151
        %p380 = pneg %p175
        %p381 = pneg %p172
        %p382 = pneg %p196
        %p383 = pneg %p193
        %p384 = pneg %p217
        %p385 = pneg %p214
        %p386 = pneg %p243
        %p387 = pneg %p240
        %s388 = sand.u32 %s230, 1
        %s389 = scalar_lea.sflag [#allocation4], %s388
        %s390 = sand.u32 %s230, 1
        %s391 = smul.addr %s390, 128
        %s392 = scalar_lea.vmem [#allocation10], %s391
        %s393 = smul.u32 16, %s28
        %s394 = smul.u32 16, %s28
        %v395 = vld [vmem:[%s346] sm:$0xff]
        %v396 = vld [vmem:[%s346 + $0x8] sm:$0xff]
        %v397 = vld [vmem:[%s346 + $0x10] sm:$0xff]
        %v398 = vld [vmem:[%s346 + $0x18] sm:$0xff]
        %v399 = vld [vmem:[%s346 + $0x20] sm:$0xff]
        %v400 = vld [vmem:[%s346 + $0x28] sm:$0xff]
        %v401 = vld [vmem:[%s346 + $0x30] sm:$0xff]
        %v402 = vld [vmem:[%s346 + $0x38] sm:$0xff]
        %v403 = vld [vmem:[%s346 + $0x40] sm:$0xff]
        %v404 = vld [vmem:[%s346 + $0x48] sm:$0xff]
        %v405 = vld [vmem:[%s346 + $0x50] sm:$0xff]
        %v406 = vld [vmem:[%s346 + $0x58] sm:$0xff]
        %v407 = vld [vmem:[%s346 + $0x60] sm:$0xff]
        %v408 = vld [vmem:[%s346 + $0x68] sm:$0xff]
        %v409 = vld [vmem:[%s346 + $0x70] sm:$0xff]
        %v410 = vld [vmem:[%s346 + $0x78] sm:$0xff]
        %v411 = vld [vmem:[%s1] sm:$0x1]
        %v413 = vlaneseq
        %v414 = vshrl.u32 %v413, 7
        %v415 = vsub.s32 0, %v414
        %v416 = vrot.slane %v411, %v415
        %v418 = vmul.f32 %v395, %v416
        %v419 = vmul.f32 %v396, %v416
        %v420 = vmul.f32 %v397, %v416
        %v421 = vmul.f32 %v398, %v416
        %v422 = vmul.f32 %v399, %v416
        %v423 = vmul.f32 %v400, %v416
        %v424 = vmul.f32 %v401, %v416
        %v425 = vmul.f32 %v402, %v416
        %v426 = vmul.f32 %v403, %v416
        %v427 = vmul.f32 %v404, %v416
        %v428 = vmul.f32 %v405, %v416
        %v429 = vmul.f32 %v406, %v416
        %v430 = vmul.f32 %v407, %v416
        %v431 = vmul.f32 %v408, %v416
        %v432 = vmul.f32 %v409, %v416
        %v433 = vmul.f32 %v410, %v416
        %v434 = vld [vmem:[#allocation5] sm:$0x1]
        %v436 = vlaneseq
        %v437 = vshrl.u32 %v436, 7
        %v438 = vsub.s32 0, %v437
        %v439 = vrot.slane %v434, %v438
        %v441 = vadd.f32 %v418, %v439
        %v442 = vadd.f32 %v419, %v439
        %v443 = vadd.f32 %v420, %v439
        %v444 = vadd.f32 %v421, %v439
        %v445 = vadd.f32 %v422, %v439
        %v446 = vadd.f32 %v423, %v439
        %v447 = vadd.f32 %v424, %v439
        %v448 = vadd.f32 %v425, %v439
        %v449 = vadd.f32 %v426, %v439
        %v450 = vadd.f32 %v427, %v439
        %v451 = vadd.f32 %v428, %v439
        %v452 = vadd.f32 %v429, %v439
        %v453 = vadd.f32 %v430, %v439
        %v454 = vadd.f32 %v431, %v439
        %v455 = vadd.f32 %v432, %v439
        %v456 = vadd.f32 %v433, %v439
        %v457 = vld [vmem:[#allocation7] sm:$0xff]
        %v458 = vld [vmem:[#allocation7 + $0x8] sm:$0xff]
        %v459 = vld [vmem:[#allocation7 + $0x10] sm:$0xff]
        %v460 = vld [vmem:[#allocation7 + $0x18] sm:$0xff]
        %v461 = vld [vmem:[#allocation7 + $0x20] sm:$0xff]
        %v462 = vld [vmem:[#allocation7 + $0x28] sm:$0xff]
        %v463 = vld [vmem:[#allocation7 + $0x30] sm:$0xff]
        %v464 = vld [vmem:[#allocation7 + $0x38] sm:$0xff]
        %v465 = vld [vmem:[#allocation7 + $0x40] sm:$0xff]
        %v466 = vld [vmem:[#allocation7 + $0x48] sm:$0xff]
        %v467 = vld [vmem:[#allocation7 + $0x50] sm:$0xff]
        %v468 = vld [vmem:[#allocation7 + $0x58] sm:$0xff]
        %v469 = vld [vmem:[#allocation7 + $0x60] sm:$0xff]
        %v470 = vld [vmem:[#allocation7 + $0x68] sm:$0xff]
        %v471 = vld [vmem:[#allocation7 + $0x70] sm:$0xff]
        %v472 = vld [vmem:[#allocation7 + $0x78] sm:$0xff]
        %v473 = vld [vmem:[#allocation7 + $0x80] sm:$0xff]
        %v474 = vld [vmem:[#allocation7 + $0x88] sm:$0xff]
        %v475 = vld [vmem:[#allocation7 + $0x90] sm:$0xff]
        %v476 = vld [vmem:[#allocation7 + $0x98] sm:$0xff]
        %v477 = vld [vmem:[#allocation7 + $0xa0] sm:$0xff]
        %v478 = vld [vmem:[#allocation7 + $0xa8] sm:$0xff]
        %v479 = vld [vmem:[#allocation7 + $0xb0] sm:$0xff]
        %v480 = vld [vmem:[#allocation7 + $0xb8] sm:$0xff]
        %v481 = vld [vmem:[#allocation7 + $0xc0] sm:$0xff]
        %v482 = vld [vmem:[#allocation7 + $0xc8] sm:$0xff]
        %v483 = vld [vmem:[#allocation7 + $0xd0] sm:$0xff]
        %v484 = vld [vmem:[#allocation7 + $0xd8] sm:$0xff]
        %v485 = vld [vmem:[#allocation7 + $0xe0] sm:$0xff]
        %v486 = vld [vmem:[#allocation7 + $0xe8] sm:$0xff]
        %v487 = vld [vmem:[#allocation7 + $0xf0] sm:$0xff]
        %v488 = vld [vmem:[#allocation7 + $0xf8] sm:$0xff]
        %v489 = vld [vmem:[%s4] sm:$0x3]
        %v491 = vlaneseq
        %v492 = vshrl.u32 %v491, 7
        %v493 = vsub.s32 0, %v492
        %v494 = vrot.slane %v489, %v493
        %v495 = vlaneseq
        %v496 = vshrl.u32 %v495, 7
        %v497 = vsub.s32 1, %v496
        %v498 = vrot.slane %v489, %v497
        %501 = vmatprep.subr.mxu0 %v488
        %502 = vmatpush1.msra.mxu0 %v487
        %503 = vmatprep.subr.mxu0 %v486
        %504 = vmatpush1.msra.mxu0 %v485
        %505 = vmatprep.subr.mxu0 %v484
        %506 = vmatpush1.msra.mxu0 %v483
        %507 = vmatprep.subr.mxu0 %v482
        %508 = vmatpush1.msra.mxu0 %v481
        %509 = vmatprep.subr.mxu0 %v480
        %510 = vmatpush1.msra.mxu0 %v479
        %511 = vmatprep.subr.mxu0 %v478
        %512 = vmatpush1.msra.mxu0 %v477
        %513 = vmatprep.subr.mxu0 %v476
        %514 = vmatpush1.msra.mxu0 %v475
        %515 = vmatprep.subr.mxu0 %v474
        %516 = vmatpush1.msra.mxu0 %v473
        %517 = vmatprep.subr.mxu0 %v472
        %518 = vmatpush1.msra.mxu0 %v471
        %519 = vmatprep.subr.mxu0 %v470
        %520 = vmatpush1.msra.mxu0 %v469
        %521 = vmatprep.subr.mxu0 %v468
        %522 = vmatpush1.msra.mxu0 %v467
        %523 = vmatprep.subr.mxu0 %v466
        %524 = vmatpush1.msra.mxu0 %v465
        %525 = vmatprep.subr.mxu0 %v464
        %526 = vmatpush1.msra.mxu0 %v463
        %527 = vmatprep.subr.mxu0 %v462
        %528 = vmatpush1.msra.mxu0 %v461
        %529 = vmatprep.subr.mxu0 %v460
        %530 = vmatpush1.msra.mxu0 %v459
        %531 = vmatprep.subr.mxu0 %v458
        %532 = vmatpush1.msra.mxu0 %v457
        %533 = vmatprep.subr.mxu0 0.0
        %534 = vmatpush2.msra.mxu0 0.0
        %535 = vmatprep.subr.mxu0 0.0
        %536 = vmatpush2.msra.mxu0 0.0
        %537 = vmatprep.subr.mxu0 0.0
        %538 = vmatpush2.msra.mxu0 0.0
        %539 = vmatprep.subr.mxu0 0.0
        %540 = vmatpush2.msra.mxu0 0.0
        %541 = vmatprep.subr.mxu0 0.0
        %542 = vmatpush2.msra.mxu0 0.0
        %543 = vmatprep.subr.mxu0 0.0
        %544 = vmatpush2.msra.mxu0 0.0
        %545 = vmatprep.subr.mxu0 0.0
        %546 = vmatpush2.msra.mxu0 0.0
        %547 = vmatprep.subr.mxu0 0.0
        %548 = vmatpush2.msra.mxu0 0.0
        %549 = vmatprep.subr.mxu0 0.0
        %550 = vmatpush2.msra.mxu0 0.0
        %551 = vmatprep.subr.mxu0 0.0
        %552 = vmatpush2.msra.mxu0 0.0
        %553 = vmatprep.subr.mxu0 0.0
        %554 = vmatpush2.msra.mxu0 0.0
        %555 = vmatprep.subr.mxu0 0.0
        %556 = vmatpush2.msra.mxu0 0.0
        %557 = vmatprep.subr.mxu0 0.0
        %558 = vmatpush2.msra.mxu0 0.0
        %559 = vmatprep.subr.mxu0 0.0
        %560 = vmatpush2.msra.mxu0 0.0
        %561 = vmatprep.subr.mxu0 0.0
        %562 = vmatpush2.msra.mxu0 0.0
        %563 = vmatprep.subr.mxu0 0.0
        %564 = vmatpush2.msra.mxu0 0.0
        %565 = vmatprep.mubr.f32.mxu0 0.0
        %566 = vmatmul.mubr.f32.gmra.mxu0 %v441
        %v567 = vpop.f32.mrf.mxu0
        %v568 = vadd.f32 %v494, %v567
        %v569 = vpop.f32.mrf.mxu0
        %v570 = vadd.f32 %v498, %v569
        %571 = vmatprep.mubr.f32.mxu0 0.0
        %572 = vmatmul.mubr.f32.gmra.mxu0 %v442
        %v573 = vpop.f32.mrf.mxu0
        %v574 = vadd.f32 %v494, %v573
        %v575 = vpop.f32.mrf.mxu0
        %v576 = vadd.f32 %v498, %v575
        %577 = vmatprep.mubr.f32.mxu0 0.0
        %578 = vmatmul.mubr.f32.gmra.mxu0 %v443
        %v579 = vpop.f32.mrf.mxu0
        %v580 = vadd.f32 %v494, %v579
        %v581 = vpop.f32.mrf.mxu0
        %v582 = vadd.f32 %v498, %v581
        %583 = vmatprep.mubr.f32.mxu0 0.0
        %584 = vmatmul.mubr.f32.gmra.mxu0 %v444
        %v585 = vpop.f32.mrf.mxu0
        %v586 = vadd.f32 %v494, %v585
        %v587 = vpop.f32.mrf.mxu0
        %v588 = vadd.f32 %v498, %v587
        %589 = vmatprep.mubr.f32.mxu0 0.0
        %590 = vmatmul.mubr.f32.gmra.mxu0 %v445
        %v591 = vpop.f32.mrf.mxu0
        %v592 = vadd.f32 %v494, %v591
        %v593 = vpop.f32.mrf.mxu0
        %v594 = vadd.f32 %v498, %v593
        %595 = vmatprep.mubr.f32.mxu0 0.0
        %596 = vmatmul.mubr.f32.gmra.mxu0 %v446
        %v597 = vpop.f32.mrf.mxu0
        %v598 = vadd.f32 %v494, %v597
        %v599 = vpop.f32.mrf.mxu0
        %v600 = vadd.f32 %v498, %v599
        %601 = vmatprep.mubr.f32.mxu0 0.0
        %602 = vmatmul.mubr.f32.gmra.mxu0 %v447
        %v603 = vpop.f32.mrf.mxu0
        %v604 = vadd.f32 %v494, %v603
        %v605 = vpop.f32.mrf.mxu0
        %v606 = vadd.f32 %v498, %v605
        %607 = vmatprep.mubr.f32.mxu0 0.0
        %608 = vmatmul.mubr.f32.gmra.mxu0 %v448
        %v609 = vpop.f32.mrf.mxu0
        %v610 = vadd.f32 %v494, %v609
        %v611 = vpop.f32.mrf.mxu0
        %v612 = vadd.f32 %v498, %v611
        %613 = vmatprep.mubr.f32.mxu0 0.0
        %614 = vmatmul.mubr.f32.gmra.mxu0 %v449
        %v615 = vpop.f32.mrf.mxu0
        %v616 = vadd.f32 %v494, %v615
        %v617 = vpop.f32.mrf.mxu0
        %v618 = vadd.f32 %v498, %v617
        %619 = vmatprep.mubr.f32.mxu0 0.0
        %620 = vmatmul.mubr.f32.gmra.mxu0 %v450
        %v621 = vpop.f32.mrf.mxu0
        %v622 = vadd.f32 %v494, %v621
        %v623 = vpop.f32.mrf.mxu0
        %v624 = vadd.f32 %v498, %v623
        %625 = vmatprep.mubr.f32.mxu0 0.0
        %626 = vmatmul.mubr.f32.gmra.mxu0 %v451
        %v627 = vpop.f32.mrf.mxu0
        %v628 = vadd.f32 %v494, %v627
        %v629 = vpop.f32.mrf.mxu0
        %v630 = vadd.f32 %v498, %v629
        %631 = vmatprep.mubr.f32.mxu0 0.0
        %632 = vmatmul.mubr.f32.gmra.mxu0 %v452
        %v633 = vpop.f32.mrf.mxu0
        %v634 = vadd.f32 %v494, %v633
        %v635 = vpop.f32.mrf.mxu0
        %v636 = vadd.f32 %v498, %v635
        %637 = vmatprep.mubr.f32.mxu0 0.0
        %638 = vmatmul.mubr.f32.gmra.mxu0 %v453
        %v639 = vpop.f32.mrf.mxu0
        %v640 = vadd.f32 %v494, %v639
        %v641 = vpop.f32.mrf.mxu0
        %v642 = vadd.f32 %v498, %v641
        %643 = vmatprep.mubr.f32.mxu0 0.0
        %644 = vmatmul.mubr.f32.gmra.mxu0 %v454
        %v645 = vpop.f32.mrf.mxu0
        %v646 = vadd.f32 %v494, %v645
        %v647 = vpop.f32.mrf.mxu0
        %v648 = vadd.f32 %v498, %v647
        %649 = vmatprep.mubr.f32.mxu0 0.0
        %650 = vmatmul.mubr.f32.gmra.mxu0 %v455
        %v651 = vpop.f32.mrf.mxu0
        %v652 = vadd.f32 %v494, %v651
        %v653 = vpop.f32.mrf.mxu0
        %v654 = vadd.f32 %v498, %v653
        %655 = vmatprep.mubr.f32.mxu0 0.0
        %656 = vmatmul.mubr.f32.gmra.mxu0 %v456
        %v657 = vpop.f32.mrf.mxu0
        %v658 = vadd.f32 %v494, %v657
        %v659 = vpop.f32.mrf.mxu0
        %v660 = vadd.f32 %v498, %v659
        %661 = vdwg.mxu0
        %v662 = vld [vmem:[%s5] sm:$0x3]
        %v664 = vlaneseq
        %v665 = vshrl.u32 %v664, 7
        %v666 = vsub.s32 0, %v665
        %v667 = vrot.slane %v662, %v666
        %v668 = vlaneseq
        %v669 = vshrl.u32 %v668, 7
        %v670 = vsub.s32 1, %v669
        %v671 = vrot.slane %v662, %v670
        %v674 = vmul.f32 %v568, %v667
        %v675 = vmul.f32 %v570, %v671
        %v676 = vmul.f32 %v574, %v667
        %v677 = vmul.f32 %v576, %v671
        %v678 = vmul.f32 %v580, %v667
        %v679 = vmul.f32 %v582, %v671
        %v680 = vmul.f32 %v586, %v667
        %v681 = vmul.f32 %v588, %v671
        %v682 = vmul.f32 %v592, %v667
        %v683 = vmul.f32 %v594, %v671
        %v684 = vmul.f32 %v598, %v667
        %v685 = vmul.f32 %v600, %v671
        %v686 = vmul.f32 %v604, %v667
        %v687 = vmul.f32 %v606, %v671
        %v688 = vmul.f32 %v610, %v667
        %v689 = vmul.f32 %v612, %v671
        %v690 = vmul.f32 %v616, %v667
        %v691 = vmul.f32 %v618, %v671
        %v692 = vmul.f32 %v622, %v667
        %v693 = vmul.f32 %v624, %v671
        %v694 = vmul.f32 %v628, %v667
        %v695 = vmul.f32 %v630, %v671
        %v696 = vmul.f32 %v634, %v667
        %v697 = vmul.f32 %v636, %v671
        %v698 = vmul.f32 %v640, %v667
        %v699 = vmul.f32 %v642, %v671
        %v700 = vmul.f32 %v646, %v667
        %v701 = vmul.f32 %v648, %v671
        %v702 = vmul.f32 %v652, %v667
        %v703 = vmul.f32 %v654, %v671
        %v704 = vmul.f32 %v658, %v667
        %v705 = vmul.f32 %v660, %v671
        %v706 = vld [vmem:[%s6] sm:$0x3]
        %v708 = vlaneseq
        %v709 = vshrl.u32 %v708, 7
        %v710 = vsub.s32 0, %v709
        %v711 = vrot.slane %v706, %v710
        %v712 = vlaneseq
        %v713 = vshrl.u32 %v712, 7
        %v714 = vsub.s32 1, %v713
        %v715 = vrot.slane %v706, %v714
        %v718 = vadd.f32 %v674, %v711
        %v719 = vadd.f32 %v675, %v715
        %v720 = vadd.f32 %v676, %v711
        %v721 = vadd.f32 %v677, %v715
        %v722 = vadd.f32 %v678, %v711
        %v723 = vadd.f32 %v679, %v715
        %v724 = vadd.f32 %v680, %v711
        %v725 = vadd.f32 %v681, %v715
        %v726 = vadd.f32 %v682, %v711
        %v727 = vadd.f32 %v683, %v715
        %v728 = vadd.f32 %v684, %v711
        %v729 = vadd.f32 %v685, %v715
        %v730 = vadd.f32 %v686, %v711
        %v731 = vadd.f32 %v687, %v715
        %v732 = vadd.f32 %v688, %v711
        %v733 = vadd.f32 %v689, %v715
        %v734 = vadd.f32 %v690, %v711
        %v735 = vadd.f32 %v691, %v715
        %v736 = vadd.f32 %v692, %v711
        %v737 = vadd.f32 %v693, %v715
        %v738 = vadd.f32 %v694, %v711
        %v739 = vadd.f32 %v695, %v715
        %v740 = vadd.f32 %v696, %v711
        %v741 = vadd.f32 %v697, %v715
        %v742 = vadd.f32 %v698, %v711
        %v743 = vadd.f32 %v699, %v715
        %v744 = vadd.f32 %v700, %v711
        %v745 = vadd.f32 %v701, %v715
        %v746 = vadd.f32 %v702, %v711
        %v747 = vadd.f32 %v703, %v715
        %v748 = vadd.f32 %v704, %v711
        %v749 = vadd.f32 %v705, %v715
        %v750 = vmax.f32 %v718, 0.0
        %v751 = vmax.f32 %v719, 0.0
        %v752 = vmax.f32 %v720, 0.0
        %v753 = vmax.f32 %v721, 0.0
        %v754 = vmax.f32 %v722, 0.0
        %v755 = vmax.f32 %v723, 0.0
        %v756 = vmax.f32 %v724, 0.0
        %v757 = vmax.f32 %v725, 0.0
        %v758 = vmax.f32 %v726, 0.0
        %v759 = vmax.f32 %v727, 0.0
        %v760 = vmax.f32 %v728, 0.0
        %v761 = vmax.f32 %v729, 0.0
        %v762 = vmax.f32 %v730, 0.0
        %v763 = vmax.f32 %v731, 0.0
        %v764 = vmax.f32 %v732, 0.0
        %v765 = vmax.f32 %v733, 0.0
        %v766 = vmax.f32 %v734, 0.0
        %v767 = vmax.f32 %v735, 0.0
        %v768 = vmax.f32 %v736, 0.0
        %v769 = vmax.f32 %v737, 0.0
        %v770 = vmax.f32 %v738, 0.0
        %v771 = vmax.f32 %v739, 0.0
        %v772 = vmax.f32 %v740, 0.0
        %v773 = vmax.f32 %v741, 0.0
        %v774 = vmax.f32 %v742, 0.0
        %v775 = vmax.f32 %v743, 0.0
        %v776 = vmax.f32 %v744, 0.0
        %v777 = vmax.f32 %v745, 0.0
        %v778 = vmax.f32 %v746, 0.0
        %v779 = vmax.f32 %v747, 0.0
        %v780 = vmax.f32 %v748, 0.0
        %v781 = vmax.f32 %v749, 0.0
        %v782 = vld [vmem:[#allocation8] sm:$0xff]
        %v783 = vld [vmem:[#allocation8 + $0x8] sm:$0xff]
        %v784 = vld [vmem:[#allocation8 + $0x10] sm:$0xff]
        %v785 = vld [vmem:[#allocation8 + $0x18] sm:$0xff]
        %v786 = vld [vmem:[#allocation8 + $0x20] sm:$0xff]
        %v787 = vld [vmem:[#allocation8 + $0x28] sm:$0xff]
        %v788 = vld [vmem:[#allocation8 + $0x30] sm:$0xff]
        %v789 = vld [vmem:[#allocation8 + $0x38] sm:$0xff]
        %v790 = vld [vmem:[#allocation8 + $0x40] sm:$0xff]
        %v791 = vld [vmem:[#allocation8 + $0x48] sm:$0xff]
        %v792 = vld [vmem:[#allocation8 + $0x50] sm:$0xff]
        %v793 = vld [vmem:[#allocation8 + $0x58] sm:$0xff]
        %v794 = vld [vmem:[#allocation8 + $0x60] sm:$0xff]
        %v795 = vld [vmem:[#allocation8 + $0x68] sm:$0xff]
        %v796 = vld [vmem:[#allocation8 + $0x70] sm:$0xff]
        %v797 = vld [vmem:[#allocation8 + $0x78] sm:$0xff]
        %v798 = vld [vmem:[#allocation8 + $0x80] sm:$0xff]
        %v799 = vld [vmem:[#allocation8 + $0x88] sm:$0xff]
        %v800 = vld [vmem:[#allocation8 + $0x90] sm:$0xff]
        %v801 = vld [vmem:[#allocation8 + $0x98] sm:$0xff]
        %v802 = vld [vmem:[#allocation8 + $0xa0] sm:$0xff]
        %v803 = vld [vmem:[#allocation8 + $0xa8] sm:$0xff]
        %v804 = vld [vmem:[#allocation8 + $0xb0] sm:$0xff]
        %v805 = vld [vmem:[#allocation8 + $0xb8] sm:$0xff]
        %v806 = vld [vmem:[#allocation8 + $0xc0] sm:$0xff]
        %v807 = vld [vmem:[#allocation8 + $0xc8] sm:$0xff]
        %v808 = vld [vmem:[#allocation8 + $0xd0] sm:$0xff]
        %v809 = vld [vmem:[#allocation8 + $0xd8] sm:$0xff]
        %v810 = vld [vmem:[#allocation8 + $0xe0] sm:$0xff]
        %v811 = vld [vmem:[#allocation8 + $0xe8] sm:$0xff]
        %v812 = vld [vmem:[#allocation8 + $0xf0] sm:$0xff]
        %v813 = vld [vmem:[#allocation8 + $0xf8] sm:$0xff]
        %v814 = vld [vmem:[%s8] sm:$0x1]
        %v816 = vlaneseq
        %v817 = vshrl.u32 %v816, 7
        %v818 = vsub.s32 0, %v817
        %v819 = vrot.slane %v814, %v818
        %821 = vmatprep.subr.mxu0 0.0
        %822 = vmatpush1.msra.mxu0 %v797
        %823 = vmatprep.subr.mxu0 0.0
        %824 = vmatpush1.msra.mxu0 %v796
        %825 = vmatprep.subr.mxu0 0.0
        %826 = vmatpush1.msra.mxu0 %v795
        %827 = vmatprep.subr.mxu0 0.0
        %828 = vmatpush1.msra.mxu0 %v794
        %829 = vmatprep.subr.mxu0 0.0
        %830 = vmatpush1.msra.mxu0 %v793
        %831 = vmatprep.subr.mxu0 0.0
        %832 = vmatpush1.msra.mxu0 %v792
        %833 = vmatprep.subr.mxu0 0.0
        %834 = vmatpush1.msra.mxu0 %v791
        %835 = vmatprep.subr.mxu0 0.0
        %836 = vmatpush1.msra.mxu0 %v790
        %837 = vmatprep.subr.mxu0 0.0
        %838 = vmatpush1.msra.mxu0 %v789
        %839 = vmatprep.subr.mxu0 0.0
        %840 = vmatpush1.msra.mxu0 %v788
        %841 = vmatprep.subr.mxu0 0.0
        %842 = vmatpush1.msra.mxu0 %v787
        %843 = vmatprep.subr.mxu0 0.0
        %844 = vmatpush1.msra.mxu0 %v786
        %845 = vmatprep.subr.mxu0 0.0
        %846 = vmatpush1.msra.mxu0 %v785
        %847 = vmatprep.subr.mxu0 0.0
        %848 = vmatpush1.msra.mxu0 %v784
        %849 = vmatprep.subr.mxu0 0.0
        %850 = vmatpush1.msra.mxu0 %v783
        %851 = vmatprep.subr.mxu0 0.0
        %852 = vmatpush1.msra.mxu0 %v782
        %853 = vmatprep.subr.mxu0 0.0
        %854 = vmatpush2.msra.mxu0 %v813
        %855 = vmatprep.subr.mxu0 0.0
        %856 = vmatpush2.msra.mxu0 %v812
        %857 = vmatprep.subr.mxu0 0.0
        %858 = vmatpush2.msra.mxu0 %v811
        %859 = vmatprep.subr.mxu0 0.0
        %860 = vmatpush2.msra.mxu0 %v810
        %861 = vmatprep.subr.mxu0 0.0
        %862 = vmatpush2.msra.mxu0 %v809
        %863 = vmatprep.subr.mxu0 0.0
        %864 = vmatpush2.msra.mxu0 %v808
        %865 = vmatprep.subr.mxu0 0.0
        %866 = vmatpush2.msra.mxu0 %v807
        %867 = vmatprep.subr.mxu0 0.0
        %868 = vmatpush2.msra.mxu0 %v806
        %869 = vmatprep.subr.mxu0 0.0
        %870 = vmatpush2.msra.mxu0 %v805
        %871 = vmatprep.subr.mxu0 0.0
        %872 = vmatpush2.msra.mxu0 %v804
        %873 = vmatprep.subr.mxu0 0.0
        %874 = vmatpush2.msra.mxu0 %v803
        %875 = vmatprep.subr.mxu0 0.0
        %876 = vmatpush2.msra.mxu0 %v802
        %877 = vmatprep.subr.mxu0 0.0
        %878 = vmatpush2.msra.mxu0 %v801
        %879 = vmatprep.subr.mxu0 0.0
        %880 = vmatpush2.msra.mxu0 %v800
        %881 = vmatprep.subr.mxu0 0.0
        %882 = vmatpush2.msra.mxu0 %v799
        %883 = vmatprep.subr.mxu0 0.0
        %884 = vmatpush2.msra.mxu0 %v798
        %885 = vmatprep.mubr.f32.mxu0 %v751
        %886 = vmatmul.mubr.f32.gmra.mxu0 %v750
        %v887 = vpop.f32.mrf.mxu0
        %v888 = vadd.f32 %v819, %v887
        %v889 = vpop.f32.mrf.mxu0
        %890 = vmatprep.mubr.f32.mxu0 %v753
        %891 = vmatmul.mubr.f32.gmra.mxu0 %v752
        %v892 = vpop.f32.mrf.mxu0
        %v893 = vadd.f32 %v819, %v892
        %v894 = vpop.f32.mrf.mxu0
        %895 = vmatprep.mubr.f32.mxu0 %v755
        %896 = vmatmul.mubr.f32.gmra.mxu0 %v754
        %v897 = vpop.f32.mrf.mxu0
        %v898 = vadd.f32 %v819, %v897
        %v899 = vpop.f32.mrf.mxu0
        %900 = vmatprep.mubr.f32.mxu0 %v757
        %901 = vmatmul.mubr.f32.gmra.mxu0 %v756
        %v902 = vpop.f32.mrf.mxu0
        %v903 = vadd.f32 %v819, %v902
        %v904 = vpop.f32.mrf.mxu0
        %905 = vmatprep.mubr.f32.mxu0 %v759
        %906 = vmatmul.mubr.f32.gmra.mxu0 %v758
        %v907 = vpop.f32.mrf.mxu0
        %v908 = vadd.f32 %v819, %v907
        %v909 = vpop.f32.mrf.mxu0
        %910 = vmatprep.mubr.f32.mxu0 %v761
        %911 = vmatmul.mubr.f32.gmra.mxu0 %v760
        %v912 = vpop.f32.mrf.mxu0
        %v913 = vadd.f32 %v819, %v912
        %v914 = vpop.f32.mrf.mxu0
        %915 = vmatprep.mubr.f32.mxu0 %v763
        %916 = vmatmul.mubr.f32.gmra.mxu0 %v762
        %v917 = vpop.f32.mrf.mxu0
        %v918 = vadd.f32 %v819, %v917
        %v919 = vpop.f32.mrf.mxu0
        %920 = vmatprep.mubr.f32.mxu0 %v765
        %921 = vmatmul.mubr.f32.gmra.mxu0 %v764
        %v922 = vpop.f32.mrf.mxu0
        %v923 = vadd.f32 %v819, %v922
        %v924 = vpop.f32.mrf.mxu0
        %925 = vmatprep.mubr.f32.mxu0 %v767
        %926 = vmatmul.mubr.f32.gmra.mxu0 %v766
        %v927 = vpop.f32.mrf.mxu0
        %v928 = vadd.f32 %v819, %v927
        %v929 = vpop.f32.mrf.mxu0
        %930 = vmatprep.mubr.f32.mxu0 %v769
        %931 = vmatmul.mubr.f32.gmra.mxu0 %v768
        %v932 = vpop.f32.mrf.mxu0
        %v933 = vadd.f32 %v819, %v932
        %v934 = vpop.f32.mrf.mxu0
        %935 = vmatprep.mubr.f32.mxu0 %v771
        %936 = vmatmul.mubr.f32.gmra.mxu0 %v770
        %v937 = vpop.f32.mrf.mxu0
        %v938 = vadd.f32 %v819, %v937
        %v939 = vpop.f32.mrf.mxu0
        %940 = vmatprep.mubr.f32.mxu0 %v773
        %941 = vmatmul.mubr.f32.gmra.mxu0 %v772
        %v942 = vpop.f32.mrf.mxu0
        %v943 = vadd.f32 %v819, %v942
        %v944 = vpop.f32.mrf.mxu0
        %945 = vmatprep.mubr.f32.mxu0 %v775
        %946 = vmatmul.mubr.f32.gmra.mxu0 %v774
        %v947 = vpop.f32.mrf.mxu0
        %v948 = vadd.f32 %v819, %v947
        %v949 = vpop.f32.mrf.mxu0
        %950 = vmatprep.mubr.f32.mxu0 %v777
        %951 = vmatmul.mubr.f32.gmra.mxu0 %v776
        %v952 = vpop.f32.mrf.mxu0
        %v953 = vadd.f32 %v819, %v952
        %v954 = vpop.f32.mrf.mxu0
        %955 = vmatprep.mubr.f32.mxu0 %v779
        %956 = vmatmul.mubr.f32.gmra.mxu0 %v778
        %v957 = vpop.f32.mrf.mxu0
        %v958 = vadd.f32 %v819, %v957
        %v959 = vpop.f32.mrf.mxu0
        %960 = vmatprep.mubr.f32.mxu0 %v781
        %961 = vmatmul.mubr.f32.gmra.mxu0 %v780
        %v962 = vpop.f32.mrf.mxu0
        %v963 = vadd.f32 %v819, %v962
        %v964 = vpop.f32.mrf.mxu0
        %965 = vdwg.mxu0
        %966 = vst [vmem:[%s392] sm:$0xff] %v888
        %967 = vst [vmem:[%s392 + $0x8] sm:$0xff] %v893
        %968 = vst [vmem:[%s392 + $0x10] sm:$0xff] %v898
        %969 = vst [vmem:[%s392 + $0x18] sm:$0xff] %v903
        %970 = vst [vmem:[%s392 + $0x20] sm:$0xff] %v908
        %971 = vst [vmem:[%s392 + $0x28] sm:$0xff] %v913
        %972 = vst [vmem:[%s392 + $0x30] sm:$0xff] %v918
        %973 = vst [vmem:[%s392 + $0x38] sm:$0xff] %v923
        %974 = vst [vmem:[%s392 + $0x40] sm:$0xff] %v928
        %975 = vst [vmem:[%s392 + $0x48] sm:$0xff] %v933
        %976 = vst [vmem:[%s392 + $0x50] sm:$0xff] %v938
        %977 = vst [vmem:[%s392 + $0x58] sm:$0xff] %v943
        %978 = vst [vmem:[%s392 + $0x60] sm:$0xff] %v948
        %979 = vst [vmem:[%s392 + $0x68] sm:$0xff] %v953
        %980 = vst [vmem:[%s392 + $0x70] sm:$0xff] %v958
        %981 = vst [vmem:[%s392 + $0x78] sm:$0xff] %v963
        %s982 = sand.u32 %s230, 1
        %s983 = scalar_lea.sflag [#allocation4], %s982
        %s984 = sand.u32 %s230, 1
        %s985 = smul.addr %s984, 128
        %s986 = scalar_lea.vmem [#allocation10], %s985
        // Predicated region
        $region73: #{tpu_custom_call.1} parent=55 // pred_check
          %p987 = pneg %p240
        $region74: #{tpu_custom_call.1} parent=55 // pred_check_branch
          %989 = sbr.rel (%p987) target = $region76
        $region75: #{tpu_custom_call.1} parent=55 // pred_region
          %s990 = smul.u32 16, %s28
          %s992 = ssub.s32 2048, 2048
          %993 = vsyncadd %s983, %s992
          %s994 = smul.addr %s990, 128
          %s995 = scalar_lea.hbm %s9, %s994
          %s996 = sshll.u32 %s986, 4
          %s997 = int_to_ptr.vmem [resolvable:$true] %s996
          %1002 = dma.vmem_to_hbm [thread:$0]  %s997, 2048, %s995, %s983, 128, 128, 8
        $region76: #{tpu_custom_call.1} parent=55 // pred_fallthru
          _
      $region56: #{tpu_custom_call.1} parent=5 // pred_fallthru
        _
      %p1003 = scmp.le.s32.totalorder 2, %s23
      // Predicated region
      $region77: #{tpu_custom_call.1} parent=5 // pred_check
        %p1004 = pneg %p1003
      $region78: #{tpu_custom_call.1} parent=5 // pred_check_branch
        %1006 = sbr.rel (%p1004) target = $region80
      $region79: #{tpu_custom_call.1} parent=5 // pred_region
        %s1007 = ssub.s32 %s23, 2
        // Predicated region
        $region81: #{tpu_custom_call.1} parent=79 // pred_check
          %p1008 = pneg %p246
        $region82: #{tpu_custom_call.1} parent=79 // pred_check_branch
          %1010 = sbr.rel (%p1008) target = $region84
        $region83: #{tpu_custom_call.1} parent=79 // pred_region
          %s1011 = sand.u32 %s231, 1
          %s1012 = scalar_lea.sflag [#allocation4], %s1011
          %s1013 = sand.u32 %s231, 1
          %s1014 = smul.addr %s1013, 128
          %s1015 = scalar_lea.vmem [#allocation10], %s1014
          %1016 = dma.done %s1012, 2048
        $region84: #{tpu_custom_call.1} parent=79 // pred_fallthru
          _
      $region80: #{tpu_custom_call.1} parent=5 // pred_fallthru
        _
    $region6: #{tpu_custom_call.1} parent=1 // loop_footer
      %s27 = sadd.s32 1, %s23
    $region7: #{tpu_custom_call.1} parent=1 // loop_footer_branch
      %22 = sbr.rel target = $region3
    $region8: #{tpu_custom_call.1} parent=1 // loop_exit
      _
    %1017 = vsyncpa [#allocation3], 1
    %s1018 = scalar_lea.sflag [#allocation3], 1
    %1019 = vsyncpa %s1018, 1
    %1020 = vsyncpa [#allocation6], 1
    %1021 = vsyncpa [#allocation9], 1
    %1022 = vsyncpa [#allocation4], 1
    %s1023 = scalar_lea.sflag [#allocation4], 1
    %1024 = vsyncpa %s1023, 1

</llo_original>
